<compile_context>
chip_gen: v7x
topology: tpu7x:2x2x1
jax: 0.10.0
libtpu: 0.0.40
codegen_flags: <defaults>
</compile_context>

<pallas_src>
import jax
import jax.numpy as jnp
from jax.experimental import pallas as pl
from jax.experimental.pallas import tpu as pltpu

_SUBLANE = 8
_TARGET_TILE_BYTES = 2 * 1024 * 1024  # per-block target; safe on v5e/v6e/v7x


def _explicit_attack_kernel(x_ref, pert_ref, o_ref):
    # x_ref / o_ref: (S_TILE, D)  one batch row's row-tile (batch dim squeezed)
    # pert_ref:      (S_TILE, D)  payload-masked perturbations (zero-padded)
    o_ref[...] = x_ref[...] + pert_ref[...]


def _round_up(x, m):
    return (x + m - 1) // m * m


def explicit_attack_forward(embedded_input, watermark_payload, perturbation_vectors):
    """JAX/Pallas equivalent of ExplicitAttack.forward.

    Args:
      embedded_input:       (B, S, D) float array.
      watermark_payload:    (W,) int/float bit vector.
      perturbation_vectors: (W, D) parameter.

    Returns:
      (B, S, D) perturbed embeddings (same dtype as embedded_input).
    """
    B, S, D = embedded_input.shape
    W, D2 = perturbation_vectors.shape
    assert D == D2, "embedding_dim mismatch"

    dtype = embedded_input.dtype
    itemsize = jnp.dtype(dtype).itemsize
    num_bits = min(W, S)

    # ---- fold the payload mask into the perturbation table (tiny, wrapper-side) ----
    bits = (watermark_payload[:num_bits] == 1).astype(dtype)[:, None]       # (nb, 1)
    masked = bits * perturbation_vectors[:num_bits].astype(dtype)           # (nb, D)

    # ---- row-tile selection on the original (B, S, D) layout ----
    # Block = (batch-squeezed, S_TILE, D).  S_TILE is a multiple of 8 (or the
    # full S for tiny sequences); D equals the full last dim (always legal).
    if S < _SUBLANE:
        S_TILE = S
    else:
        rows_by_bytes = max(
            _SUBLANE,
            (_TARGET_TILE_BYTES // max(1, D * itemsize)) // _SUBLANE * _SUBLANE,
        )
        S_TILE = min(_round_up(num_bits, _SUBLANE), rows_by_bytes)
    n_row_tiles = pl.cdiv(num_bits, S_TILE)
    R_cover = n_row_tiles * S_TILE  # rows read+written per batch (>= num_bits)

    # Perturbation table padded only to the covered rows (NOT to S).  Rows in
    # [num_bits, R_cover) therefore get x + 0 (harmless rewrite); rows of a
    # partial edge block past S are dropped by Pallas' OOB-write masking.
    pert_pad = jnp.zeros((R_cover, D), dtype=dtype).at[:num_bits].set(masked)

    block_bytes = S_TILE * D * itemsize
    # x / out / pert streams, double-buffered, plus slack; capped at 48 MiB so
    # it stays under v7x's 64 MiB physical VMEM.
    vmem_limit = int(min(max(4 * 3 * block_bytes, 16 * 1024 * 1024),
                         48 * 1024 * 1024))

    cost = pl.CostEstimate(
        flops=B * R_cover * D,
        transcendentals=0,
        bytes_accessed=(2 * B * R_cover * D + R_cover * D) * itemsize,
    )

    # Grid: row tiles (outer) x batch (inner).  The pert block index depends
    # only on the outer axis, so it is fetched once per row tile and reused for
    # every batch row.  Both axes are independent -> "parallel".
    grid = (n_row_tiles, B)

    out = pl.pallas_call(
        _explicit_attack_kernel,
        out_shape=jax.ShapeDtypeStruct((B, S, D), dtype),
        grid=grid,
        in_specs=[
            # x: one batch row (squeezed) x one row tile; dense (S_TILE, D) slab.
            pl.BlockSpec((None, S_TILE, D), lambda r, b: (b, r, 0)),
            # pert: indexed only by the row-tile axis (reused across the batch).
            pl.BlockSpec((S_TILE, D), lambda r, b: (r, 0)),
        ],
        out_specs=pl.BlockSpec((None, S_TILE, D), lambda r, b: (b, r, 0)),
        # Output aliases the input: rows >= R_cover (the untouched tail) are
        # never read or written, so HBM traffic is ~2*B*min(W,S)*D bytes
        # instead of 2*B*S*D.
        input_output_aliases={0: 0},
        compiler_params=pltpu.CompilerParams(
            dimension_semantics=("parallel", "parallel"),
            vmem_limit_bytes=vmem_limit,
        ),
        cost_estimate=cost,
    )(embedded_input, pert_pad)

    return out


def explicit_attack_reference(embedded_input, watermark_payload, perturbation_vectors):
    """Pure-JAX reference mirroring the PyTorch loop (vectorized)."""
    B, S, D = embedded_input.shape
    W = perturbation_vectors.shape[0]
    nb = min(W, S)
    dtype = embedded_input.dtype
    bits = (watermark_payload[:nb] == 1).astype(dtype)[:, None]
    rows = bits * perturbation_vectors[:nb].astype(dtype)          # (nb, D)
    pert = jnp.zeros((S, D), dtype).at[:nb].set(rows)
    return embedded_input + pert[None]


if __name__ == "__main__":
    # Small shapes consistent with the module's forward:
    # batch=2, seq_len=16, embedding_dim=32, watermark_length=8
    # (seq_len > watermark_length so the aliased, never-touched tail path is
    #  exercised alongside the watermarked prefix.)
    B, S, D, W = 2, 16, 32, 8

    key = jax.random.PRNGKey(0)
    k_emb, k_pert, k_payload = jax.random.split(key, 3)

    embedded_input = jax.random.normal(k_emb, (B, S, D), dtype=jnp.float32)
    # Deterministic parameter init: matches torch.randn(W, D) * 0.01 in spirit.
    perturbation_vectors = jax.random.normal(k_pert, (W, D), dtype=jnp.float32) * 0.01
    watermark_payload = jax.random.bernoulli(k_payload, 0.5, (W,)).astype(jnp.int32)

    # Compute the pure-JAX reference first (the kernel output aliases its input).
    ref = jax.block_until_ready(
        explicit_attack_reference(embedded_input, watermark_payload,
                                  perturbation_vectors))

    out = explicit_attack_forward(embedded_input, watermark_payload,
                                  perturbation_vectors)
    out = jax.block_until_ready(out)

    assert out.shape == (B, S, D)
    assert jnp.allclose(out, ref, atol=1e-6), "mismatch vs reference"

    print("KERNEL_OK")
</pallas_src>

<mosaic_0001>
module attributes {stable_mosaic.version = 11 : i64} {
  func.func @_explicit_attack_kernel(%arg0: i32, %arg1: i32, %arg2: memref<1x8x32xf32, #tpu.memory_space<vmem>>, %arg3: memref<8x32xf32, #tpu.memory_space<vmem>>, %arg4: memref<1x8x32xf32, #tpu.memory_space<vmem>>) attributes {dimension_semantics = [#tpu.dimension_semantics<parallel>, #tpu.dimension_semantics<parallel>], iteration_bounds = array<i64: 1, 2>, scalar_prefetch = 0 : i64, scratch_operands = 0 : i64, tpu.core_type = #tpu.core_type<tc>, window_params = [{transform_indices = @transform_0, window_bounds = array<i64: 1, 8, 32>}, {transform_indices = @transform_1, window_bounds = array<i64: 8, 32>}, {transform_indices = @transform_2, window_bounds = array<i64: 1, 8, 32>}]} {
    %c0 = arith.constant 0 : index
    %c0_0 = arith.constant 0 : index
    %c0_1 = arith.constant 0 : index
    %0 = vector.load %arg2[%c0, %c0_0, %c0_1] : memref<1x8x32xf32, #tpu.memory_space<vmem>>, vector<1x8x32xf32>
    %1 = vector.shape_cast %0 : vector<1x8x32xf32> to vector<8x32xf32>
    %c0_2 = arith.constant 0 : index
    %c0_3 = arith.constant 0 : index
    %2 = vector.load %arg3[%c0_2, %c0_3] : memref<8x32xf32, #tpu.memory_space<vmem>>, vector<8x32xf32>
    %3 = arith.addf %1, %2 : vector<8x32xf32>
    %c0_4 = arith.constant 0 : index
    %c0_5 = arith.constant 0 : index
    %c0_6 = arith.constant 0 : index
    %4 = vector.load %arg4[%c0_4, %c0_5, %c0_6] : memref<1x8x32xf32, #tpu.memory_space<vmem>>, vector<1x8x32xf32>
    %5 = vector.shape_cast %4 : vector<1x8x32xf32> to vector<8x32xf32>
    %6 = vector.shape_cast %3 : vector<8x32xf32> to vector<1x8x32xf32>
    tpu.vector_store %arg4[%c0_4, %c0_5, %c0_6], %6 {strides = array<i32>} : memref<1x8x32xf32, #tpu.memory_space<vmem>>, vector<1x8x32xf32>,
    return
  }
  func.func @transform_0(%arg0: i32, %arg1: i32) -> (i32, i32, i32) {
    %c0_i32 = arith.constant 0 : i32
    %c0_i32_0 = arith.constant 0 : i32
    return %arg1, %arg0, %c0_i32 : i32, i32, i32
  }
  func.func @transform_1(%arg0: i32, %arg1: i32) -> (i32, i32) {
    %c0_i32 = arith.constant 0 : i32
    %c0_i32_0 = arith.constant 0 : i32
    return %arg0, %c0_i32 : i32, i32
  }
  func.func @transform_2(%arg0: i32, %arg1: i32) -> (i32, i32, i32) {
    %c0_i32 = arith.constant 0 : i32
    %c0_i32_0 = arith.constant 0 : i32
    return %arg1, %arg0, %c0_i32 : i32, i32, i32
  }
}

</mosaic_0001>

<llo_original>
// kernel: tpu_custom_call.1
$region0: #{tpu_custom_call.1}
  #allocation0 [shape = 'u32[]', space=smem, size = 0x4, offset = 0x4, fixed_abs, tag = 'smem constant byte address 0x4 - core index']
  #allocation1 [shape = 'u32[144,128]{1,0:T(1,128)}', space=vmem, size = 0x12000, scoped, tag = 'internal scratch']
  %s0 = inlined_call_operand.hbm [shape: f32[2,16,32], index: 0, kind: input, shape index: {}, may-alias: {0,2}]
  %s1 = inlined_call_operand.vmem [shape: f32[8,32], index: 1, kind: input, shape index: {}]
  %s2 = inlined_call_operand.hbm [shape: f32[2,16,32], index: 2, kind: output, shape index: {}, may-alias: {0,2}]
  %s3 = sld [smem:[#allocation0]]
  $region45: #{tpu_custom_call.1} parent=0
    _
  %s5 = ssub.s32 1, %s3
  %s6 = scalar_select 0, %s5, %s3
  $region1: #{tpu_custom_call.1} parent=0
    #allocation2 [shape = 'u8[8192]{0}', space=vmem, size = 0x2000, scoped, tag = 'input window, operand 0']
    #allocation3 [shape = 's32[2]{0}', space=sflag, size = 0x8, scoped, tag = 'scoped memory for tpu_custom_call.1']
    #allocation4 [shape = 's32[2]{0}', space=sflag, size = 0x8, scoped, tag = 'scoped memory for tpu_custom_call.1']
    #allocation5 [shape = 'u8[8192]{0}', space=vmem, size = 0x2000, scoped, tag = 'output window, operand 0']
    %7 = vsyncpa [#allocation3], 0
    %s8 = scalar_lea.sflag [#allocation3], 1
    %9 = vsyncpa %s8, 0
    %10 = vsyncpa [#allocation4], 0
    %s11 = scalar_lea.sflag [#allocation4], 1
    %12 = vsyncpa %s11, 0
    loop: start=0, step=1, limit=4
    $region2: #{tpu_custom_call.1} parent=1 // loop_pre_header
      _
    $region3: #{tpu_custom_call.1} parent=1 // loop_header
      %s14 = sphi 0, %s18
      %p15 = scmp.ge.s32.totalorder %s14, 4
      %s21 = sphi 0, %s33
      %s22 = sphi 0, %s29
      %s23 = sphi 0, %s21
      %s24 = sphi 0, %s22
      %s25 = sphi 0, %s23
      %s26 = sphi 0, %s24
      %s38 = sphi 0, %s40
      %s41 = sphi 0, %s38
      %s42 = sphi 0, %s41
      %s58 = sphi 0, %s42
      %s64 = sphi 0, %s66
      %s67 = sphi 0, %s64
      %s68 = sphi 0, %s67
      %s84 = sphi 0, %s68
      %s92 = sphi 0, %s94
      %s95 = sphi 0, %s92
      %s96 = sphi 0, %s95
      %s112 = sphi 0, %s96
    $region4: #{tpu_custom_call.1} parent=1 // loop_header_branch
      %17 = sbr.rel (%p15) target = $region8
    $region5: #{tpu_custom_call.1} parent=1 // loop_body
      %s19 = ssub.s32 %s14, 1
      %s20 = ssub.s32 %s14, 2
      %s27 = sadd.s32 1, %s22
      %p28 = scmp.ge.s32.totalorder %s27, 2
      %s29 = scalar_select %p28, 0, %s27
      %s30 = sadd.s32 1, %s21
      %s31 = scalar_select %p28, %s30, %s21
      %p32 = scmp.ge.s32.totalorder %s31, 1
      %s33 = scalar_select %p32, 0, %s31
      %s34 = ssub.s32 %s22, %s29
      %s35 = ssub.s32 %s21, %s33
      %s36 = sor.u32 %s34, %s35
      %p37 = scmp.eq.s32.totalorder %s36, 0
      %s39 = sadd.s32 %s38, 1
      %s40 = scalar_select %p37, %s38, %s39
      %p43 = pneg %p37
      %p44 = scmp.eq.s32.totalorder %s14, 1
      %p45 = por %p43, %p44
      %p46 = scmp.ne.s32.totalorder %s38, %s41
      %p47 = scmp.eq.s32.totalorder %s14, 0
      %p48 = por %p46, %p47
      %p49 = scmp.ne.s32.totalorder %s38, %s41
      %p50 = scmp.eq.s32.totalorder %s19, 1
      %p51 = por %p49, %p50
      %p52 = scmp.ne.s32.totalorder %s41, %s42
      %p53 = scmp.eq.s32.totalorder %s19, 0
      %p54 = por %p52, %p53
      %p55 = scmp.ne.s32.totalorder %s41, %s42
      %p56 = scmp.eq.s32.totalorder %s20, 1
      %p57 = por %p55, %p56
      %p59 = scmp.ne.s32.totalorder %s42, %s58
      %p60 = scmp.eq.s32.totalorder %s20, 0
      %p61 = por %p59, %p60
      %s62 = ssub.s32 %s21, %s33
      %p63 = scmp.eq.s32.totalorder %s62, 0
      %s65 = sadd.s32 %s64, 1
      %s66 = scalar_select %p63, %s64, %s65
      %p69 = pneg %p63
      %p70 = scmp.eq.s32.totalorder %s14, 1
      %p71 = por %p69, %p70
      %p72 = scmp.ne.s32.totalorder %s64, %s67
      %p73 = scmp.eq.s32.totalorder %s14, 0
      %p74 = por %p72, %p73
      %p75 = scmp.ne.s32.totalorder %s64, %s67
      %p76 = scmp.eq.s32.totalorder %s19, 1
      %p77 = por %p75, %p76
      %p78 = scmp.ne.s32.totalorder %s67, %s68
      %p79 = scmp.eq.s32.totalorder %s19, 0
      %p80 = por %p78, %p79
      %p81 = scmp.ne.s32.totalorder %s67, %s68
      %p82 = scmp.eq.s32.totalorder %s20, 1
      %p83 = por %p81, %p82
      %p85 = scmp.ne.s32.totalorder %s68, %s84
      %p86 = scmp.eq.s32.totalorder %s20, 0
      %p87 = por %p85, %p86
      %s88 = ssub.s32 %s22, %s29
      %s89 = ssub.s32 %s21, %s33
      %s90 = sor.u32 %s88, %s89
      %p91 = scmp.eq.s32.totalorder %s90, 0
      %s93 = sadd.s32 %s92, 1
      %s94 = scalar_select %p91, %s92, %s93
      %p97 = pneg %p91
      %p98 = scmp.eq.s32.totalorder %s14, 1
      %p99 = por %p97, %p98
      %p100 = scmp.ne.s32.totalorder %s92, %s95
      %p101 = scmp.eq.s32.totalorder %s14, 0
      %p102 = por %p100, %p101
      %p103 = scmp.ne.s32.totalorder %s92, %s95
      %p104 = scmp.eq.s32.totalorder %s19, 1
      %p105 = por %p103, %p104
      %p106 = scmp.ne.s32.totalorder %s95, %s96
      %p107 = scmp.eq.s32.totalorder %s19, 0
      %p108 = por %p106, %p107
      %p109 = scmp.ne.s32.totalorder %s95, %s96
      %p110 = scmp.eq.s32.totalorder %s20, 1
      %p111 = por %p109, %p110
      %p113 = scmp.ne.s32.totalorder %s96, %s112
      %p114 = scmp.eq.s32.totalorder %s20, 0
      %p115 = por %p113, %p114
      %p116 = scmp.le.s32.totalorder 1, %s14
      %p117 = scmp.lt.s32.totalorder %s14, 3
      %p118 = pnand %p116, %p117
      %p119 = pneg %p118
      // Predicated region
      $region9: #{tpu_custom_call.1} parent=5 // pred_check
        _
      $region10: #{tpu_custom_call.1} parent=5 // pred_check_branch
        %121 = sbr.rel (%p118) target = $region12
      $region11: #{tpu_custom_call.1} parent=5 // pred_region
        %s122 = ssub.s32 %s14, 1
        // Predicated region
        $region13: #{tpu_custom_call.1} parent=11 // pred_check
          %p123 = pneg %p80
        $region14: #{tpu_custom_call.1} parent=11 // pred_check_branch
          %125 = sbr.rel (%p123) target = $region16
        $region15: #{tpu_custom_call.1} parent=11 // pred_region
          %p126 = scmp.lt.s32.totalorder %s23, 0
          %s127 = scalar_select %p126, %s23, 0
          %s128 = smul.addr %s127, 8
          %s129 = scalar_lea.vmem %s1, %s128
        $region16: #{tpu_custom_call.1} parent=11 // pred_fallthru
          _
      $region12: #{tpu_custom_call.1} parent=5 // pred_fallthru
        _
      %p130 = scmp.lt.s32.totalorder %s14, 2
      // Predicated region
      $region17: #{tpu_custom_call.1} parent=5 // pred_check
        %p131 = pneg %p130
      $region18: #{tpu_custom_call.1} parent=5 // pred_check_branch
        %133 = sbr.rel (%p131) target = $region20
      $region19: #{tpu_custom_call.1} parent=5 // pred_region
        // Predicated region
        $region21: #{tpu_custom_call.1} parent=19 // pred_check
          %p134 = pneg %p48
        $region22: #{tpu_custom_call.1} parent=19 // pred_check_branch
          %136 = sbr.rel (%p134) target = $region24
        $region23: #{tpu_custom_call.1} parent=19 // pred_region
          %s137 = sand.u32 %s38, 1
          %s138 = scalar_lea.sflag [#allocation3], %s137
          %s139 = sand.u32 %s38, 1
          %s140 = smul.addr %s139, 8
          %s141 = scalar_lea.vmem [#allocation2], %s140
          %s143 = ssub.s32 128, 128
          %144 = vsyncadd %s138, %s143
          %s145 = smul.addr %s22, 2
          %s146 = sadd.s32 %s21, %s145
          %s147 = smul.addr %s146, 128
          %s148 = scalar_lea.hbm %s0, %s147
          %s150 = sshll.u32 %s141, 4
          %s151 = int_to_ptr.vmem [resolvable:$true] %s150
          %153 = dma.hbm_to_vmem [thread:$0]  %s148, 128, %s151, %s138
        $region24: #{tpu_custom_call.1} parent=19 // pred_fallthru
          _
      $region20: #{tpu_custom_call.1} parent=5 // pred_fallthru
        _
      %p154 = scmp.le.s32.totalorder 1, %s14
      %p155 = scmp.lt.s32.totalorder %s14, 3
      %p156 = pnand %p154, %p155
      %p157 = pneg %p156
      // Predicated region
      $region25: #{tpu_custom_call.1} parent=5 // pred_check
        _
      $region26: #{tpu_custom_call.1} parent=5 // pred_check_branch
        %159 = sbr.rel (%p156) target = $region28
      $region27: #{tpu_custom_call.1} parent=5 // pred_region
        %s160 = ssub.s32 %s14, 1
        %s161 = sand.u32 %s41, 1
        %s162 = scalar_lea.sflag [#allocation3], %s161
        %s163 = sand.u32 %s41, 1
        %s164 = smul.addr %s163, 8
        %s165 = scalar_lea.vmem [#allocation2], %s164
        // Predicated region
        $region29: #{tpu_custom_call.1} parent=27 // pred_check
          %p166 = pneg %p54
        $region30: #{tpu_custom_call.1} parent=27 // pred_check_branch
          %168 = sbr.rel (%p166) target = $region32
        $region31: #{tpu_custom_call.1} parent=27 // pred_region
          %169 = dma.done %s162, 128
        $region32: #{tpu_custom_call.1} parent=27 // pred_fallthru
          _
        %s170 = sand.u32 %s41, 1
        %s171 = scalar_lea.sflag [#allocation3], %s170
        %s172 = sand.u32 %s41, 1
        %s173 = smul.addr %s172, 8
        %s174 = scalar_lea.vmem [#allocation2], %s173
        %p175 = pneg %p54
        %p176 = pneg %p51
        %p177 = scmp.lt.s32.totalorder %s23, 0
        %s178 = scalar_select %p177, %s23, 0
        %s179 = smul.addr %s178, 8
        %s180 = scalar_lea.vmem %s1, %s179
        %p181 = pneg %p80
        %p182 = pneg %p77
        %p183 = pneg %p108
        %p184 = pneg %p105
        %s185 = sand.u32 %s95, 1
        %s186 = scalar_lea.sflag [#allocation4], %s185
        %s187 = sand.u32 %s95, 1
        %s188 = smul.addr %s187, 8
        %s189 = scalar_lea.vmem [#allocation5], %s188
        %p190 = scmp.lt.s32.totalorder %s23, 0
        %s191 = scalar_select %p190, %s23, 0
        %s192 = smul.addr %s191, 8
        %s193 = scalar_lea.vmem %s1, %s192
        %v194 = vld [vmem:[%s165] sm:$0xff]
        %v195 = vld [vmem:[%s193] sm:$0xff]
        %v196 = vadd.f32 %v194, %v195
        %vm197 = vcmask 261120
        %198 = vst.msk [vmem:[%s189] sm:$0xff] %vm197, %v196
        %s199 = sand.u32 %s95, 1
        %s200 = scalar_lea.sflag [#allocation4], %s199
        %s201 = sand.u32 %s95, 1
        %s202 = smul.addr %s201, 8
        %s203 = scalar_lea.vmem [#allocation5], %s202
        // Predicated region
        $region33: #{tpu_custom_call.1} parent=27 // pred_check
          %p204 = pneg %p105
        $region34: #{tpu_custom_call.1} parent=27 // pred_check_branch
          %206 = sbr.rel (%p204) target = $region36
        $region35: #{tpu_custom_call.1} parent=27 // pred_region
          %s208 = ssub.s32 128, 128
          %209 = vsyncadd %s200, %s208
          %s210 = smul.addr %s24, 2
          %s211 = sadd.s32 %s23, %s210
          %s212 = smul.addr %s211, 128
          %s213 = scalar_lea.hbm %s2, %s212
          %s215 = sshll.u32 %s203, 4
          %s216 = int_to_ptr.vmem [resolvable:$true] %s215
          %218 = dma.vmem_to_hbm [thread:$0]  %s216, 128, %s213, %s200
        $region36: #{tpu_custom_call.1} parent=27 // pred_fallthru
          _
      $region28: #{tpu_custom_call.1} parent=5 // pred_fallthru
        _
      %p219 = scmp.le.s32.totalorder 2, %s14
      // Predicated region
      $region37: #{tpu_custom_call.1} parent=5 // pred_check
        %p220 = pneg %p219
      $region38: #{tpu_custom_call.1} parent=5 // pred_check_branch
        %222 = sbr.rel (%p220) target = $region40
      $region39: #{tpu_custom_call.1} parent=5 // pred_region
        %s223 = ssub.s32 %s14, 2
        // Predicated region
        $region41: #{tpu_custom_call.1} parent=39 // pred_check
          %p224 = pneg %p111
        $region42: #{tpu_custom_call.1} parent=39 // pred_check_branch
          %226 = sbr.rel (%p224) target = $region44
        $region43: #{tpu_custom_call.1} parent=39 // pred_region
          %s227 = sand.u32 %s96, 1
          %s228 = scalar_lea.sflag [#allocation4], %s227
          %s229 = sand.u32 %s96, 1
          %s230 = smul.addr %s229, 8
          %s231 = scalar_lea.vmem [#allocation5], %s230
          %232 = dma.done %s228, 128
        $region44: #{tpu_custom_call.1} parent=39 // pred_fallthru
          _
      $region40: #{tpu_custom_call.1} parent=5 // pred_fallthru
        _
    $region6: #{tpu_custom_call.1} parent=1 // loop_footer
      %s18 = sadd.s32 1, %s14
    $region7: #{tpu_custom_call.1} parent=1 // loop_footer_branch
      %13 = sbr.rel target = $region3
    $region8: #{tpu_custom_call.1} parent=1 // loop_exit
      _
    %233 = vsyncpa [#allocation3], 1
    %s234 = scalar_lea.sflag [#allocation3], 1
    %235 = vsyncpa %s234, 1
    %236 = vsyncpa [#allocation4], 1
    %s237 = scalar_lea.sflag [#allocation4], 1
    %238 = vsyncpa %s237, 1

</llo_original>
